<compile_context>
chip_gen: v6e
topology: v6e:2x2x1
jax: 0.10.0
libtpu: 0.0.40
codegen_flags: <defaults>
</compile_context>

<pallas_src>
import functools

import jax
import jax.numpy as jnp
from jax.experimental import pallas as pl
from jax.experimental.pallas import tpu as pltpu


def _resync_bn1d_train_kernel(scalars_ref, x_ref, mask_ref, w_ref, b_ref,
                              rm_ref, rv_ref,
                              y_ref, new_rm_ref, new_rv_ref,
                              *, eps, momentum):
    """One feature tile: x (N, TC), mask (1, N), params/stats (1, TC)."""
    inv_count = scalars_ref[0]     # 1 / mask_bs              (hoisted to SMEM)
    unbias = scalars_ref[1]        # mask_bs / (mask_bs - 1)  (hoisted to SMEM)

    rm = rm_ref[...]                              # (1, TC) f32
    x = x_ref[...].astype(jnp.float32)            # (N, TC)
    mask_row = mask_ref[...]                      # (1, N), 1.0 where label >= 0

    # Center on the running mean (already resident per tile) so the two masked
    # MXU reductions below do NOT depend on each other's results -- they can be
    # issued back-to-back with no MXU->VPU->MXU bubble.
    xs = x - rm                                   # (N, TC)
    s1 = jnp.dot(mask_row, xs, preferred_element_type=jnp.float32) * inv_count
    s2 = jnp.dot(mask_row, xs * xs, preferred_element_type=jnp.float32) * inv_count

    mean = rm + s1                                # E_mask[x]
    var = jnp.maximum(s2 - s1 * s1, 0.0)          # E_mask[(x-rm)^2]-(E_mask[x-rm])^2

    # Running-stat update for this feature tile (module's momentum convention:
    # new = m*old + (1-m)*batch, with the n/(n-1) unbiasing on the variance).
    new_rm_ref[...] = momentum * rm + (1.0 - momentum) * mean
    new_rv_ref[...] = momentum * rv_ref[...] + (1.0 - momentum) * var * unbias

    # Folded normalize + affine: y = x*scale + (b - mean*scale)
    # -> a single per-element mul-add; rsqrt lowers to the EUP (own VLIW slot).
    scale = jax.lax.rsqrt(var + eps) * w_ref[...]          # (1, TC)
    shift = b_ref[...] - mean * scale                      # (1, TC)
    y_ref[...] = (x * scale + shift).astype(y_ref.dtype)


def _vmem_capacity_bytes():
    """Physical VMEM of the current generation; conservative fallback."""
    try:
        cap = int(pltpu.get_tpu_info().vmem_capacity_bytes)
        if cap > 0:
            return cap
    except Exception:
        pass
    return 64 * 1024 * 1024    # v7x per-TensorCore VMEM (smallest of v5e/v6e/v7x)


def _pick_tile_c(c, n, x_bytes, out_bytes, vmem_budget):
    """Largest lane tile (multiple of 128, <=2048) whose pipeline buffers AND
    in-kernel f32 temporaries fit the generation-aware VMEM budget."""
    if c <= 128:
        # Single full-extent block: block dim == array dim is always legal,
        # even when not a multiple of 128.
        return c
    # Per-lane bytes: double-buffered x input + double-buffered y output
    # + f32 temporaries (xs, xs*xs, plus the f32 upcast when x is 16-bit)
    # + a small share for the (1, C) param/stat pipelines.
    n_temps = 2 if x_bytes >= 4 else 3
    per_lane = 2 * n * x_bytes + 2 * n * out_bytes + n_temps * n * 4 + 64
    max_tc = max(128, (vmem_budget // per_lane) // 128 * 128)
    tile_c = min(((c + 127) // 128) * 128, 2048, max_tc)
    # Keep >= 2 grid steps so v7x's two TensorCores both get work on the
    # "parallel" C axis (costs at most one ~0.35 us step on v5e/v6e).
    two_step_cap = max(128, (((c + 1) // 2) + 127) // 128 * 128)
    return min(tile_c, two_step_cap)


def resync_batchnorm1d_train(x, label, weight, bias, running_mean, running_var,
                             *, eps=1e-5, momentum=0.9):
    """Training-mode forward. Returns (y, new_running_mean, new_running_var).

    x: (N, C), label: (N,) -- rows with label < 0 are excluded from the
    statistics, exactly like the boolean-mask select in the module.
    """
    # TODO(synk): multi-process DDP all-gather has no single-device equivalent;
    # with world_size == 1 it is the identity, which is what we implement.
    n, c = x.shape
    out_dtype = x.dtype
    x_bytes = jnp.dtype(x.dtype).itemsize
    out_bytes = jnp.dtype(out_dtype).itemsize

    vmem_cap = _vmem_capacity_bytes()
    vmem_budget = int(vmem_cap * 0.45)
    vmem_limit = max(32 << 20, min(int(vmem_cap * 0.7), vmem_cap - (8 << 20)))

    tile_c = _pick_tile_c(c, n, x_bytes, out_bytes, vmem_budget)
    num_tiles = pl.cdiv(c, tile_c)

    # x and all outputs stay unpadded: the ragged last feature tile (if any) is
    # a partial Pallas block (masked store on that tile only). Only the tiny
    # (1, C) params/stats inputs are padded so their blocks read fully in-bounds.
    c_params = num_tiles * tile_c
    pad = c_params - c

    def _param(p, fill=0.0):
        p = p.astype(jnp.float32).reshape(1, c)
        if pad:
            p = jnp.pad(p, ((0, 0), (0, pad)), constant_values=fill)
        return p

    w_p = _param(weight)
    b_p = _param(bias)
    rm_p = _param(running_mean)
    rv_p = _param(running_var, 1.0)

    # Hoisted scalar work: masked-row count + unbiasing factor, computed once
    # in the wrapper and passed as SMEM scalars (degenerate counts guarded).
    mask_row = (label >= 0).astype(jnp.float32).reshape(1, n)
    count = jnp.sum(mask_row)
    inv_count = 1.0 / jnp.maximum(count, 1.0)          # guard count == 0
    unbias = count / jnp.maximum(count - 1.0, 1.0)     # guard count <= 1
    scalars = jnp.stack([inv_count, unbias]).astype(jnp.float32)

    kernel = functools.partial(_resync_bn1d_train_kernel,
                               eps=float(eps), momentum=float(momentum))

    col_spec = pl.BlockSpec((1, tile_c), lambda j: (0, j))
    y, new_rm, new_rv = pl.pallas_call(
        kernel,
        grid=(num_tiles,),
        in_specs=[
            pl.BlockSpec(memory_space=pltpu.MemorySpace.SMEM),    # scalars
            pl.BlockSpec((n, tile_c), lambda j: (0, j)),          # x tile
            pl.BlockSpec((1, n), lambda j: (0, 0)),               # mask row
            col_spec,                                             # weight
            col_spec,                                             # bias
            col_spec,                                             # running_mean
            col_spec,                                             # running_var
        ],
        out_specs=(
            pl.BlockSpec((n, tile_c), lambda j: (0, j)),          # y tile
            col_spec,                                             # new running_mean
            col_spec,                                             # new running_var
        ),
        out_shape=(
            jax.ShapeDtypeStruct((n, c), out_dtype),
            jax.ShapeDtypeStruct((1, c), jnp.float32),
            jax.ShapeDtypeStruct((1, c), jnp.float32),
        ),
        compiler_params=pltpu.CompilerParams(
            dimension_semantics=("parallel",),   # v7x: shard C-tiles on 2 TCs
            vmem_limit_bytes=int(vmem_limit),
        ),
    )(scalars, x, mask_row, w_p, b_p, rm_p, rv_p)

    return y, new_rm[0], new_rv[0]


def _reference(x, label, weight, bias, running_mean, running_var,
               eps=1e-5, momentum=0.9):
    """Pure-JAX reference matching the PyTorch module (training, single proc)."""
    keep = label >= 0
    mask_feature = x[keep].astype(jnp.float32)
    mask_bs = mask_feature.shape[0]
    mean = jnp.mean(mask_feature, axis=0)
    var = jnp.mean((mask_feature - mean) ** 2, axis=0)   # unbiased=False
    new_rm = momentum * running_mean + (1 - momentum) * mean
    new_rv = momentum * running_var + (1 - momentum) * var * (mask_bs / (mask_bs - 1))
    y = (x - mean) / jnp.sqrt(var + eps)
    y = y * weight.reshape(1, -1) + bias.reshape(1, -1)
    return y, new_rm, new_rv


if __name__ == "__main__":
    eps = 1e-5
    momentum = 0.9
    key = jax.random.PRNGKey(0)

    # --- primary small test (matches the module's BatchNorm1d usage) ---------
    num_features = 32
    batch = 8
    k0, k1, k2, k3 = jax.random.split(key, 4)
    x = jax.random.normal(k0, (batch, num_features), dtype=jnp.float32)
    # labels: some negative entries so the masked-statistics path is exercised.
    label = jnp.array([1.0, 0.0, -1.0, 2.0, -1.0, 3.0, 0.0, 1.0], dtype=jnp.float32)
    # label_type is gathered in the module but never used to mask the features.

    weight = jnp.ones((num_features,), dtype=jnp.float32)
    bias = jnp.zeros((num_features,), dtype=jnp.float32)
    running_mean = jnp.zeros((num_features,), dtype=jnp.float32)
    running_var = jnp.ones((num_features,), dtype=jnp.float32)

    y, new_rm, new_rv = resync_batchnorm1d_train(
        x, label, weight, bias, running_mean, running_var,
        eps=eps, momentum=momentum)
    jax.block_until_ready((y, new_rm, new_rv))

    y_ref, rm_ref, rv_ref = _reference(
        x, label, weight, bias, running_mean, running_var, eps, momentum)
    assert jnp.allclose(y, y_ref, atol=1e-4, rtol=1e-4)
    assert jnp.allclose(new_rm, rm_ref, atol=1e-5, rtol=1e-5)
    assert jnp.allclose(new_rv, rv_ref, atol=1e-5, rtol=1e-5)

    # --- ragged-feature-tail test (C not a multiple of 128, no x pad/slice) --
    n2, c2 = 16, 200
    k4, k5, k6, k7, k8 = jax.random.split(k1, 5)
    x2 = jax.random.normal(k4, (n2, c2), dtype=jnp.float32)
    label2 = jnp.where(jax.random.uniform(k5, (n2,)) < 0.25, -1.0, 1.0)
    w2 = jax.random.normal(k6, (c2,), dtype=jnp.float32) * 0.1 + 1.0
    b2 = jax.random.normal(k7, (c2,), dtype=jnp.float32) * 0.1
    rm2 = jax.random.normal(k8, (c2,), dtype=jnp.float32) * 0.1
    rv2 = jnp.ones((c2,), dtype=jnp.float32)

    y2, nrm2, nrv2 = resync_batchnorm1d_train(
        x2, label2, w2, b2, rm2, rv2, eps=eps, momentum=momentum)
    jax.block_until_ready((y2, nrm2, nrv2))
    y2_ref, rm2_ref, rv2_ref = _reference(x2, label2, w2, b2, rm2, rv2, eps, momentum)
    assert jnp.allclose(y2, y2_ref, atol=1e-4, rtol=1e-4)
    assert jnp.allclose(nrm2, rm2_ref, atol=1e-5, rtol=1e-5)
    assert jnp.allclose(nrv2, rv2_ref, atol=1e-5, rtol=1e-5)

    print("KERNEL_OK")
</pallas_src>

<mosaic_0001>
module attributes {stable_mosaic.version = 11 : i64} {
  func.func @_resync_bn1d_train_kernel(%arg0: i32, %arg1: memref<2xf32, #tpu.memory_space<smem>>, %arg2: memref<8x32xf32, #tpu.memory_space<vmem>>, %arg3: memref<1x8xf32, #tpu.memory_space<vmem>>, %arg4: memref<1x32xf32, #tpu.memory_space<vmem>>, %arg5: memref<1x32xf32, #tpu.memory_space<vmem>>, %arg6: memref<1x32xf32, #tpu.memory_space<vmem>>, %arg7: memref<1x32xf32, #tpu.memory_space<vmem>>, %arg8: memref<8x32xf32, #tpu.memory_space<vmem>>, %arg9: memref<1x32xf32, #tpu.memory_space<vmem>>, %arg10: memref<1x32xf32, #tpu.memory_space<vmem>>) attributes {dimension_semantics = [#tpu.dimension_semantics<parallel>], iteration_bounds = array<i64: 1>, scalar_prefetch = 0 : i64, scratch_operands = 0 : i64, tpu.core_type = #tpu.core_type<tc>, window_params = [{transform_indices = @transform_0, window_bounds = array<i64: 2>}, {transform_indices = @transform_1, window_bounds = array<i64: 8, 32>}, {pipeline_mode = #tpu.pipeline_mode<synchronous>, transform_indices = @transform_2, window_bounds = array<i64: 1, 8>}, {transform_indices = @transform_3, window_bounds = array<i64: 1, 32>}, {transform_indices = @transform_4, window_bounds = array<i64: 1, 32>}, {transform_indices = @transform_5, window_bounds = array<i64: 1, 32>}, {transform_indices = @transform_6, window_bounds = array<i64: 1, 32>}, {transform_indices = @transform_7, window_bounds = array<i64: 8, 32>}, {transform_indices = @transform_8, window_bounds = array<i64: 1, 32>}, {transform_indices = @transform_9, window_bounds = array<i64: 1, 32>}]} {
    %c0 = arith.constant 0 : index
    %0 = memref.load %arg1[%c0] : memref<2xf32, #tpu.memory_space<smem>>
    %c1 = arith.constant 1 : index
    %1 = memref.load %arg1[%c1] : memref<2xf32, #tpu.memory_space<smem>>
    %c0_0 = arith.constant 0 : index
    %c0_1 = arith.constant 0 : index
    %2 = vector.load %arg6[%c0_0, %c0_1] : memref<1x32xf32, #tpu.memory_space<vmem>>, vector<1x32xf32>
    %c0_2 = arith.constant 0 : index
    %c0_3 = arith.constant 0 : index
    %3 = vector.load %arg2[%c0_2, %c0_3] : memref<8x32xf32, #tpu.memory_space<vmem>>, vector<8x32xf32>
    %c0_4 = arith.constant 0 : index
    %c0_5 = arith.constant 0 : index
    %4 = vector.load %arg3[%c0_4, %c0_5] : memref<1x8xf32, #tpu.memory_space<vmem>>, vector<1x8xf32>
    %5 = vector.broadcast %2 : vector<1x32xf32> to vector<8x32xf32>
    %6 = arith.subf %3, %5 : vector<8x32xf32>
    %cst = arith.constant dense<0.000000e+00> : vector<1x32xf32>
    %7 = tpu.matmul %4, %6, %cst {dimension_numbers = #tpu.dot_dimension_numbers<[1], [0], [0], [1], [0, 0, 1, 1], [], []>} : vector<1x8xf32>, vector<8x32xf32>, vector<1x32xf32> -> vector<1x32xf32>
    %8 = vector.broadcast %0 : f32 to vector<1x32xf32>
    %9 = arith.mulf %7, %8 : vector<1x32xf32>
    %10 = arith.mulf %6, %6 : vector<8x32xf32>
    %cst_6 = arith.constant dense<0.000000e+00> : vector<1x32xf32>
    %11 = tpu.matmul %4, %10, %cst_6 {dimension_numbers = #tpu.dot_dimension_numbers<[1], [0], [0], [1], [0, 0, 1, 1], [], []>} : vector<1x8xf32>, vector<8x32xf32>, vector<1x32xf32> -> vector<1x32xf32>
    %12 = vector.broadcast %0 : f32 to vector<1x32xf32>
    %13 = arith.mulf %11, %12 : vector<1x32xf32>
    %14 = arith.addf %2, %9 : vector<1x32xf32>
    %15 = arith.mulf %9, %9 : vector<1x32xf32>
    %16 = arith.subf %13, %15 : vector<1x32xf32>
    %cst_7 = arith.constant 0.000000e+00 : f32
    %17 = vector.broadcast %cst_7 : f32 to vector<1x32xf32>
    %18 = arith.maximumf %16, %17 : vector<1x32xf32>
    %cst_8 = arith.constant 0.899999976 : f32
    %19 = vector.broadcast %cst_8 : f32 to vector<1x32xf32>
    %20 = arith.mulf %19, %2 : vector<1x32xf32>
    %cst_9 = arith.constant 1.000000e-01 : f32
    %21 = vector.broadcast %cst_9 : f32 to vector<1x32xf32>
    %22 = arith.mulf %21, %14 : vector<1x32xf32>
    %23 = arith.addf %20, %22 : vector<1x32xf32>
    %c0_10 = arith.constant 0 : index
    %c0_11 = arith.constant 0 : index
    %24 = vector.load %arg9[%c0_10, %c0_11] : memref<1x32xf32, #tpu.memory_space<vmem>>, vector<1x32xf32>
    tpu.vector_store %arg9[%c0_10, %c0_11], %23 {strides = array<i32>} : memref<1x32xf32, #tpu.memory_space<vmem>>, vector<1x32xf32>,
    %c0_12 = arith.constant 0 : index
    %c0_13 = arith.constant 0 : index
    %25 = vector.load %arg7[%c0_12, %c0_13] : memref<1x32xf32, #tpu.memory_space<vmem>>, vector<1x32xf32>
    %cst_14 = arith.constant 0.899999976 : f32
    %26 = vector.broadcast %cst_14 : f32 to vector<1x32xf32>
    %27 = arith.mulf %26, %25 : vector<1x32xf32>
    %cst_15 = arith.constant 1.000000e-01 : f32
    %28 = vector.broadcast %cst_15 : f32 to vector<1x32xf32>
    %29 = arith.mulf %28, %18 : vector<1x32xf32>
    %30 = vector.broadcast %1 : f32 to vector<1x32xf32>
    %31 = arith.mulf %29, %30 : vector<1x32xf32>
    %32 = arith.addf %27, %31 : vector<1x32xf32>
    %c0_16 = arith.constant 0 : index
    %c0_17 = arith.constant 0 : index
    %33 = vector.load %arg10[%c0_16, %c0_17] : memref<1x32xf32, #tpu.memory_space<vmem>>, vector<1x32xf32>
    tpu.vector_store %arg10[%c0_16, %c0_17], %32 {strides = array<i32>} : memref<1x32xf32, #tpu.memory_space<vmem>>, vector<1x32xf32>,
    %cst_18 = arith.constant 9.99999974E-6 : f32
    %34 = vector.broadcast %cst_18 : f32 to vector<1x32xf32>
    %35 = arith.addf %18, %34 : vector<1x32xf32>
    %36 = math.rsqrt %35 : vector<1x32xf32>
    %c0_19 = arith.constant 0 : index
    %c0_20 = arith.constant 0 : index
    %37 = vector.load %arg4[%c0_19, %c0_20] : memref<1x32xf32, #tpu.memory_space<vmem>>, vector<1x32xf32>
    %38 = arith.mulf %36, %37 : vector<1x32xf32>
    %c0_21 = arith.constant 0 : index
    %c0_22 = arith.constant 0 : index
    %39 = vector.load %arg5[%c0_21, %c0_22] : memref<1x32xf32, #tpu.memory_space<vmem>>, vector<1x32xf32>
    %40 = arith.mulf %14, %38 : vector<1x32xf32>
    %41 = arith.subf %39, %40 : vector<1x32xf32>
    %42 = vector.broadcast %38 : vector<1x32xf32> to vector<8x32xf32>
    %43 = arith.mulf %3, %42 : vector<8x32xf32>
    %44 = vector.broadcast %41 : vector<1x32xf32> to vector<8x32xf32>
    %45 = arith.addf %43, %44 : vector<8x32xf32>
    %c0_23 = arith.constant 0 : index
    %c0_24 = arith.constant 0 : index
    %46 = vector.load %arg8[%c0_23, %c0_24] : memref<8x32xf32, #tpu.memory_space<vmem>>, vector<8x32xf32>
    tpu.vector_store %arg8[%c0_23, %c0_24], %45 {strides = array<i32>} : memref<8x32xf32, #tpu.memory_space<vmem>>, vector<8x32xf32>,
    return
  }
  func.func @transform_0(%arg0: i32) -> i32 {
    %c0_i32 = arith.constant 0 : i32
    %c0_i32_0 = arith.constant 0 : i32
    return %c0_i32 : i32
  }
  func.func @transform_1(%arg0: i32) -> (i32, i32) {
    %c0_i32 = arith.constant 0 : i32
    %c0_i32_0 = arith.constant 0 : i32
    return %c0_i32, %arg0 : i32, i32
  }
  func.func @transform_2(%arg0: i32) -> (i32, i32) {
    %c0_i32 = arith.constant 0 : i32
    %c0_i32_0 = arith.constant 0 : i32
    %c0_i32_1 = arith.constant 0 : i32
    return %c0_i32, %c0_i32_0 : i32, i32
  }
  func.func @transform_3(%arg0: i32) -> (i32, i32) {
    %c0_i32 = arith.constant 0 : i32
    %c0_i32_0 = arith.constant 0 : i32
    return %c0_i32, %arg0 : i32, i32
  }
  func.func @transform_4(%arg0: i32) -> (i32, i32) {
    %c0_i32 = arith.constant 0 : i32
    %c0_i32_0 = arith.constant 0 : i32
    return %c0_i32, %arg0 : i32, i32
  }
  func.func @transform_5(%arg0: i32) -> (i32, i32) {
    %c0_i32 = arith.constant 0 : i32
    %c0_i32_0 = arith.constant 0 : i32
    return %c0_i32, %arg0 : i32, i32
  }
  func.func @transform_6(%arg0: i32) -> (i32, i32) {
    %c0_i32 = arith.constant 0 : i32
    %c0_i32_0 = arith.constant 0 : i32
    return %c0_i32, %arg0 : i32, i32
  }
  func.func @transform_7(%arg0: i32) -> (i32, i32) {
    %c0_i32 = arith.constant 0 : i32
    %c0_i32_0 = arith.constant 0 : i32
    return %c0_i32, %arg0 : i32, i32
  }
  func.func @transform_8(%arg0: i32) -> (i32, i32) {
    %c0_i32 = arith.constant 0 : i32
    %c0_i32_0 = arith.constant 0 : i32
    return %c0_i32, %arg0 : i32, i32
  }
  func.func @transform_9(%arg0: i32) -> (i32, i32) {
    %c0_i32 = arith.constant 0 : i32
    %c0_i32_0 = arith.constant 0 : i32
    return %c0_i32, %arg0 : i32, i32
  }
}

</mosaic_0001>

<llo_original>
// kernel: tpu_custom_call.1
$region0: #{tpu_custom_call.1}
  #allocation0 [shape = 'u32[]', space=smem, size = 0x4, offset = 0x4, fixed_abs, tag = 'smem constant byte address 0x4 - core index']
  #allocation1 [shape = 'u32[144,128]{1,0:T(1,128)}', space=vmem, size = 0x12000, scoped, tag = 'internal scratch']
  %s0 = inlined_call_operand.hbm [shape: f32[2], index: 0, kind: input, shape index: {}]
  %s1 = inlined_call_operand.hbm [shape: f32[8,32], index: 1, kind: input, shape index: {}]
  %s2 = inlined_call_operand.vmem [shape: f32[1,8], index: 2, kind: input, shape index: {}]
  %s3 = inlined_call_operand.vmem [shape: f32[1,32], index: 3, kind: input, shape index: {}]
  %s4 = inlined_call_operand.vmem [shape: f32[1,32], index: 4, kind: input, shape index: {}]
  %s5 = inlined_call_operand.vmem [shape: f32[1,32], index: 5, kind: input, shape index: {}]
  %s6 = inlined_call_operand.vmem [shape: f32[1,32], index: 6, kind: input, shape index: {}]
  %s7 = inlined_call_operand.hbm [shape: f32[8,32], index: 7, kind: output, shape index: {0}]
  %s8 = inlined_call_operand.hbm [shape: f32[1,32], index: 8, kind: output, shape index: {1}]
  %s9 = inlined_call_operand.hbm [shape: f32[1,32], index: 9, kind: output, shape index: {2}]
  %10 = xla_tuple %s7, %s8, %s9
  %s11 = sld [smem:[#allocation0]]
  $region62: #{tpu_custom_call.1} parent=0
    _
  %s13 = ssub.s32 1, %s11
  %s14 = scalar_select 0, %s13, %s11
  $region1: #{tpu_custom_call.1} parent=0
    #allocation2 [shape = 'u8[512]{0}', space=smem, size = 0x200, scoped, tag = 'input window, operand 0, single buffered']
    #allocation3 [shape = 's32[1]{0}', space=sflag, size = 0x4, scoped, tag = 'scoped memory for tpu_custom_call.1']
    #allocation4 [shape = 's32[1]{0}', space=sflag, size = 0x4, scoped, tag = 'scoped memory for tpu_custom_call.1']
    #allocation5 [shape = 's32[1]{0}', space=sflag, size = 0x4, scoped, tag = 'scoped memory for tpu_custom_call.1']
    #allocation6 [shape = 'u8[4096]{0}', space=vmem, size = 0x1000, scoped, tag = 'input window, operand 1, single buffered']
    #allocation7 [shape = 'u8[4096]{0}', space=vmem, size = 0x1000, scoped, tag = 'output window, operand 0, single buffered']
    #allocation8 [shape = 'u8[512]{0}', space=vmem, size = 0x400, scoped, tag = 'output window, operand 1, single buffered']
    #allocation9 [shape = 's32[1]{0}', space=sflag, size = 0x4, scoped, tag = 'scoped memory for tpu_custom_call.1']
    #allocation10 [shape = 'u8[512]{0}', space=vmem, size = 0x400, scoped, tag = 'output window, operand 2, single buffered']
    %15 = vsyncpa [#allocation5], 0
    %16 = vsyncpa [#allocation3], 0
    %17 = vsyncpa [#allocation4], 0
    %18 = vsyncpa [#allocation9], 0
    // Predicated region
    $region2: #{tpu_custom_call.1} parent=1 // pred_check
      _
    $region3: #{tpu_custom_call.1} parent=1 // pred_check_branch
      %20 = sbr.rel (0) target = $region5
    $region4: #{tpu_custom_call.1} parent=1 // pred_region
      %s22 = ssub.s32 16, 16
      %23 = vsyncadd [#allocation5], %s22
      %26 = dma.hbm_to_smem %s0, 16, [#allocation2], [#allocation5]
    $region5: #{tpu_custom_call.1} parent=1 // pred_fallthru
      _
    // Predicated region
    $region6: #{tpu_custom_call.1} parent=1 // pred_check
      _
    $region7: #{tpu_custom_call.1} parent=1 // pred_check_branch
      %28 = sbr.rel (0) target = $region9
    $region8: #{tpu_custom_call.1} parent=1 // pred_region
      %s30 = ssub.s32 128, 128
      %31 = vsyncadd [#allocation3], %s30
      %s33 = sshll.u32 [#allocation6], 4
      %s34 = int_to_ptr.vmem [resolvable:$true] %s33
      %36 = dma.hbm_to_vmem [thread:$0]  %s1, 128, %s34, [#allocation3]
    $region9: #{tpu_custom_call.1} parent=1 // pred_fallthru
      _
    // Predicated region
    $region10: #{tpu_custom_call.1} parent=1 // pred_check
      _
    $region11: #{tpu_custom_call.1} parent=1 // pred_check_branch
      %38 = sbr.rel (0) target = $region13
    $region12: #{tpu_custom_call.1} parent=1 // pred_region
      _
    $region13: #{tpu_custom_call.1} parent=1 // pred_fallthru
      _
    // Predicated region
    $region14: #{tpu_custom_call.1} parent=1 // pred_check
      _
    $region15: #{tpu_custom_call.1} parent=1 // pred_check_branch
      %40 = sbr.rel (0) target = $region17
    $region16: #{tpu_custom_call.1} parent=1 // pred_region
      _
    $region17: #{tpu_custom_call.1} parent=1 // pred_fallthru
      _
    // Predicated region
    $region18: #{tpu_custom_call.1} parent=1 // pred_check
      _
    $region19: #{tpu_custom_call.1} parent=1 // pred_check_branch
      %42 = sbr.rel (0) target = $region21
    $region20: #{tpu_custom_call.1} parent=1 // pred_region
      _
    $region21: #{tpu_custom_call.1} parent=1 // pred_fallthru
      _
    // Predicated region
    $region22: #{tpu_custom_call.1} parent=1 // pred_check
      _
    $region23: #{tpu_custom_call.1} parent=1 // pred_check_branch
      %44 = sbr.rel (0) target = $region25
    $region24: #{tpu_custom_call.1} parent=1 // pred_region
      _
    $region25: #{tpu_custom_call.1} parent=1 // pred_fallthru
      _
    // Predicated region
    $region26: #{tpu_custom_call.1} parent=1 // pred_check
      _
    $region27: #{tpu_custom_call.1} parent=1 // pred_check_branch
      %46 = sbr.rel (0) target = $region29
    $region28: #{tpu_custom_call.1} parent=1 // pred_region
      _
    $region29: #{tpu_custom_call.1} parent=1 // pred_fallthru
      _
    // Predicated region
    $region30: #{tpu_custom_call.1} parent=1 // pred_check
      _
    $region31: #{tpu_custom_call.1} parent=1 // pred_check_branch
      %48 = sbr.rel (0) target = $region33
    $region32: #{tpu_custom_call.1} parent=1 // pred_region
      %49 = dma.done [#allocation5], 16
    $region33: #{tpu_custom_call.1} parent=1 // pred_fallthru
      _
    // Predicated region
    $region34: #{tpu_custom_call.1} parent=1 // pred_check
      _
    $region35: #{tpu_custom_call.1} parent=1 // pred_check_branch
      %51 = sbr.rel (0) target = $region37
    $region36: #{tpu_custom_call.1} parent=1 // pred_region
      %52 = dma.done [#allocation3], 128
    $region37: #{tpu_custom_call.1} parent=1 // pred_fallthru
      _
    %53 = sfence
    %s54 = sld [smem:[#allocation2]]
    %s55 = sld [smem:[#allocation2 + $0x1]]
    %v56 = vld [vmem:[%s5] sm:$0x1]
    %v57 = vld [vmem:[#allocation6] sm:$0xff]
    %v58 = vld [vmem:[%s2] sm:$0x1]
    %v60 = vlaneseq
    %v61 = vshrl.u32 %v60, 7
    %v62 = vsub.s32 0, %v61
    %v63 = vrot.slane %v56, %v62
    %v65 = vsub.f32 %v57, %v63
    %vm66 = vcmask 64512
    %v68 = vsel %vm66, %v58, 0
    %70 = vmatprep.subr.mxu0 0.0
    %71 = vmatpush1.msra.mxu0 0.0
    %72 = vmatprep.subr.mxu0 0.0
    %73 = vmatpush1.msra.mxu0 0.0
    %74 = vmatprep.subr.mxu0 0.0
    %75 = vmatpush1.msra.mxu0 0.0
    %76 = vmatprep.subr.mxu0 0.0
    %77 = vmatpush1.msra.mxu0 0.0
    %78 = vmatprep.subr.mxu0 0.0
    %79 = vmatpush1.msra.mxu0 0.0
    %80 = vmatprep.subr.mxu0 0.0
    %81 = vmatpush1.msra.mxu0 0.0
    %82 = vmatprep.subr.mxu0 0.0
    %83 = vmatpush1.msra.mxu0 0.0
    %84 = vmatprep.subr.mxu0 0.0
    %85 = vmatpush1.msra.mxu0 0.0
    %86 = vmatprep.subr.mxu0 0.0
    %87 = vmatpush1.msra.mxu0 0.0
    %88 = vmatprep.subr.mxu0 0.0
    %89 = vmatpush1.msra.mxu0 0.0
    %90 = vmatprep.subr.mxu0 0.0
    %91 = vmatpush1.msra.mxu0 0.0
    %92 = vmatprep.subr.mxu0 0.0
    %93 = vmatpush1.msra.mxu0 0.0
    %94 = vmatprep.subr.mxu0 0.0
    %95 = vmatpush1.msra.mxu0 0.0
    %96 = vmatprep.subr.mxu0 0.0
    %97 = vmatpush1.msra.mxu0 0.0
    %98 = vmatprep.subr.mxu0 0.0
    %99 = vmatpush1.msra.mxu0 0.0
    %100 = vmatprep.subr.mxu0 0.0
    %101 = vmatpush1.msra.mxu0 %v65
    %102 = vmatprep.subr.mxu0 0.0
    %103 = vmatpush2.msra.mxu0 0.0
    %104 = vmatprep.subr.mxu0 0.0
    %105 = vmatpush2.msra.mxu0 0.0
    %106 = vmatprep.subr.mxu0 0.0
    %107 = vmatpush2.msra.mxu0 0.0
    %108 = vmatprep.subr.mxu0 0.0
    %109 = vmatpush2.msra.mxu0 0.0
    %110 = vmatprep.subr.mxu0 0.0
    %111 = vmatpush2.msra.mxu0 0.0
    %112 = vmatprep.subr.mxu0 0.0
    %113 = vmatpush2.msra.mxu0 0.0
    %114 = vmatprep.subr.mxu0 0.0
    %115 = vmatpush2.msra.mxu0 0.0
    %116 = vmatprep.subr.mxu0 0.0
    %117 = vmatpush2.msra.mxu0 0.0
    %118 = vmatprep.subr.mxu0 0.0
    %119 = vmatpush2.msra.mxu0 0.0
    %120 = vmatprep.subr.mxu0 0.0
    %121 = vmatpush2.msra.mxu0 0.0
    %122 = vmatprep.subr.mxu0 0.0
    %123 = vmatpush2.msra.mxu0 0.0
    %124 = vmatprep.subr.mxu0 0.0
    %125 = vmatpush2.msra.mxu0 0.0
    %126 = vmatprep.subr.mxu0 0.0
    %127 = vmatpush2.msra.mxu0 0.0
    %128 = vmatprep.subr.mxu0 0.0
    %129 = vmatpush2.msra.mxu0 0.0
    %130 = vmatprep.subr.mxu0 0.0
    %131 = vmatpush2.msra.mxu0 0.0
    %132 = vmatprep.subr.mxu0 0.0
    %133 = vmatpush2.msra.mxu0 0.0
    %134 = vmatprep.mubr.f32.mxu0 0.0
    %135 = vmatmul.mubr.f32.gmra.mxu0 %v68
    %v136 = vpop.f32.mrf.mxu0
    %v137 = vadd.f32 0.0, %v136
    %v138 = vpop.f32.mrf.mxu0
    %139 = vdwg.mxu0
    %v140 = vstv %s54
    %v141 = vmul.f32 %v137, %v140
    %v142 = vmul.f32 %v65, %v65
    %143 = vmatprep.subr.mxu0 0.0
    %144 = vmatpush1.msra.mxu0 0.0
    %145 = vmatprep.subr.mxu0 0.0
    %146 = vmatpush1.msra.mxu0 0.0
    %147 = vmatprep.subr.mxu0 0.0
    %148 = vmatpush1.msra.mxu0 0.0
    %149 = vmatprep.subr.mxu0 0.0
    %150 = vmatpush1.msra.mxu0 0.0
    %151 = vmatprep.subr.mxu0 0.0
    %152 = vmatpush1.msra.mxu0 0.0
    %153 = vmatprep.subr.mxu0 0.0
    %154 = vmatpush1.msra.mxu0 0.0
    %155 = vmatprep.subr.mxu0 0.0
    %156 = vmatpush1.msra.mxu0 0.0
    %157 = vmatprep.subr.mxu0 0.0
    %158 = vmatpush1.msra.mxu0 0.0
    %159 = vmatprep.subr.mxu0 0.0
    %160 = vmatpush1.msra.mxu0 0.0
    %161 = vmatprep.subr.mxu0 0.0
    %162 = vmatpush1.msra.mxu0 0.0
    %163 = vmatprep.subr.mxu0 0.0
    %164 = vmatpush1.msra.mxu0 0.0
    %165 = vmatprep.subr.mxu0 0.0
    %166 = vmatpush1.msra.mxu0 0.0
    %167 = vmatprep.subr.mxu0 0.0
    %168 = vmatpush1.msra.mxu0 0.0
    %169 = vmatprep.subr.mxu0 0.0
    %170 = vmatpush1.msra.mxu0 0.0
    %171 = vmatprep.subr.mxu0 0.0
    %172 = vmatpush1.msra.mxu0 0.0
    %173 = vmatprep.subr.mxu0 0.0
    %174 = vmatpush1.msra.mxu0 %v142
    %175 = vmatprep.subr.mxu0 0.0
    %176 = vmatpush2.msra.mxu0 0.0
    %177 = vmatprep.subr.mxu0 0.0
    %178 = vmatpush2.msra.mxu0 0.0
    %179 = vmatprep.subr.mxu0 0.0
    %180 = vmatpush2.msra.mxu0 0.0
    %181 = vmatprep.subr.mxu0 0.0
    %182 = vmatpush2.msra.mxu0 0.0
    %183 = vmatprep.subr.mxu0 0.0
    %184 = vmatpush2.msra.mxu0 0.0
    %185 = vmatprep.subr.mxu0 0.0
    %186 = vmatpush2.msra.mxu0 0.0
    %187 = vmatprep.subr.mxu0 0.0
    %188 = vmatpush2.msra.mxu0 0.0
    %189 = vmatprep.subr.mxu0 0.0
    %190 = vmatpush2.msra.mxu0 0.0
    %191 = vmatprep.subr.mxu0 0.0
    %192 = vmatpush2.msra.mxu0 0.0
    %193 = vmatprep.subr.mxu0 0.0
    %194 = vmatpush2.msra.mxu0 0.0
    %195 = vmatprep.subr.mxu0 0.0
    %196 = vmatpush2.msra.mxu0 0.0
    %197 = vmatprep.subr.mxu0 0.0
    %198 = vmatpush2.msra.mxu0 0.0
    %199 = vmatprep.subr.mxu0 0.0
    %200 = vmatpush2.msra.mxu0 0.0
    %201 = vmatprep.subr.mxu0 0.0
    %202 = vmatpush2.msra.mxu0 0.0
    %203 = vmatprep.subr.mxu0 0.0
    %204 = vmatpush2.msra.mxu0 0.0
    %205 = vmatprep.subr.mxu0 0.0
    %206 = vmatpush2.msra.mxu0 0.0
    %207 = vmatprep.mubr.f32.mxu0 0.0
    %208 = vmatmul.mubr.f32.gmra.mxu0 %v68
    %v209 = vpop.f32.mrf.mxu0
    %v210 = vadd.f32 0.0, %v209
    %v211 = vpop.f32.mrf.mxu0
    %212 = vdwg.mxu0
    %v213 = vmul.f32 %v210, %v140
    %v214 = vadd.f32 %v56, %v141
    %v215 = vmul.f32 %v141, %v141
    %v216 = vsub.f32 %v213, %v215
    %v217 = vmax.f32 %v216, 0.0
    %v218 = vmul.f32 %v56, 0.9
    %v219 = vmul.f32 %v214, 0.1
    %v220 = vadd.f32 %v218, %v219
    %vm221 = vcmask 253952
    %222 = vst.msk [vmem:[#allocation8] sm:$0x1] %vm221, %v220
    %v223 = vld [vmem:[%s6] sm:$0x1]
    %v224 = vmul.f32 %v223, 0.9
    %v225 = vmul.f32 %v217, 0.1
    %v226 = vstv %s55
    %v227 = vmul.f32 %v225, %v226
    %v228 = vadd.f32 %v224, %v227
    %229 = vst.msk [vmem:[#allocation10] sm:$0x1] %vm221, %v228
    %v230 = vadd.f32 %v217, 1e-05
    %v231 = vrsqrt.pop %v230
    %v232 = vld [vmem:[%s3] sm:$0x1]
    %v233 = vmul.f32 %v231, %v232
    %v234 = vld [vmem:[%s4] sm:$0x1]
    %v235 = vmul.f32 %v214, %v233
    %v236 = vsub.f32 %v234, %v235
    %v237 = vlaneseq
    %v238 = vshrl.u32 %v237, 7
    %v239 = vsub.s32 0, %v238
    %v240 = vrot.slane %v233, %v239
    %v241 = vmul.f32 %v57, %v240
    %v243 = vlaneseq
    %v244 = vshrl.u32 %v243, 7
    %v245 = vsub.s32 0, %v244
    %v246 = vrot.slane %v236, %v245
    %v248 = vadd.f32 %v241, %v246
    %vm249 = vcmask 261120
    %250 = vst.msk [vmem:[#allocation7] sm:$0xff] %vm249, %v248
    // Predicated region
    $region38: #{tpu_custom_call.1} parent=1 // pred_check
      _
    $region39: #{tpu_custom_call.1} parent=1 // pred_check_branch
      %252 = sbr.rel (0) target = $region41
    $region40: #{tpu_custom_call.1} parent=1 // pred_region
      %s254 = ssub.s32 128, 128
      %255 = vsyncadd [#allocation4], %s254
      %s257 = sshll.u32 [#allocation7], 4
      %s258 = int_to_ptr.vmem [resolvable:$true] %s257
      %260 = dma.vmem_to_hbm [thread:$0]  %s258, 128, %s7, [#allocation4]
    $region41: #{tpu_custom_call.1} parent=1 // pred_fallthru
      _
    // Predicated region
    $region42: #{tpu_custom_call.1} parent=1 // pred_check
      _
    $region43: #{tpu_custom_call.1} parent=1 // pred_check_branch
      %262 = sbr.rel (0) target = $region45
    $region44: #{tpu_custom_call.1} parent=1 // pred_region
      %s264 = ssub.s32 16, 16
      %265 = vsyncadd [#allocation9], %s264
      %s267 = sshll.u32 [#allocation8], 4
      %s268 = int_to_ptr.vmem [resolvable:$true] %s267
      %270 = dma.vmem_to_hbm [thread:$0]  %s268, 16, %s8, [#allocation9]
    $region45: #{tpu_custom_call.1} parent=1 // pred_fallthru
      _
    // Predicated region
    $region46: #{tpu_custom_call.1} parent=1 // pred_check
      _
    $region47: #{tpu_custom_call.1} parent=1 // pred_check_branch
      %272 = sbr.rel (0) target = $region49
    $region48: #{tpu_custom_call.1} parent=1 // pred_region
      %s274 = ssub.s32 16, 16
      %275 = vsyncadd [#allocation9], %s274
      %s277 = sshll.u32 [#allocation10], 4
      %s278 = int_to_ptr.vmem [resolvable:$true] %s277
      %280 = dma.vmem_to_hbm [thread:$0]  %s278, 16, %s9, [#allocation9]
    $region49: #{tpu_custom_call.1} parent=1 // pred_fallthru
      _
    // Predicated region
    $region50: #{tpu_custom_call.1} parent=1 // pred_check
      _
    $region51: #{tpu_custom_call.1} parent=1 // pred_check_branch
      %282 = sbr.rel (0) target = $region53
    $region52: #{tpu_custom_call.1} parent=1 // pred_region
      %283 = dma.done [#allocation4], 128
    $region53: #{tpu_custom_call.1} parent=1 // pred_fallthru
      _
    // Predicated region
    $region54: #{tpu_custom_call.1} parent=1 // pred_check
      _
    $region55: #{tpu_custom_call.1} parent=1 // pred_check_branch
      %285 = sbr.rel (0) target = $region57
    $region56: #{tpu_custom_call.1} parent=1 // pred_region
      %286 = dma.done [#allocation9], 16
    $region57: #{tpu_custom_call.1} parent=1 // pred_fallthru
      _
    // Predicated region
    $region58: #{tpu_custom_call.1} parent=1 // pred_check
      _
    $region59: #{tpu_custom_call.1} parent=1 // pred_check_branch
      %288 = sbr.rel (0) target = $region61
    $region60: #{tpu_custom_call.1} parent=1 // pred_region
      %289 = dma.done [#allocation9], 16
    $region61: #{tpu_custom_call.1} parent=1 // pred_fallthru
      _
    %290 = vsyncpa [#allocation3], 1
    %291 = vsyncpa [#allocation4], 1
    %292 = vsyncpa [#allocation9], 1
    %293 = vsyncpa [#allocation5], 1

</llo_original>
